<compile_context>
chip_gen: v7x
topology: tpu7x:2x2x1
jax: 0.10.0
libtpu: 0.0.40
codegen_flags: <defaults>
</compile_context>

<pallas_src>
import jax
import jax.numpy as jnp
import numpy as np
from jax.experimental import pallas as pl
from jax.experimental.pallas import tpu as pltpu


# ----------------------------------------------------------------------------
# Schedule construction (mirrors DDIMScheduler(scaled_linear) + DiscreteSchedule)
# ----------------------------------------------------------------------------
def make_sigmas(num_train_timesteps=1000, beta_start=0.00085, beta_end=0.012):
    betas = np.linspace(beta_start ** 0.5, beta_end ** 0.5,
                        num_train_timesteps, dtype=np.float64) ** 2
    alphas = 1.0 - betas
    alphas_cumprod = np.cumprod(alphas)
    sigmas = ((1.0 - alphas_cumprod) / alphas_cumprod) ** 0.5
    return jnp.asarray(sigmas, dtype=jnp.float32)


def sigma_to_t(sigma, log_sigmas):
    """Non-quantized sigma->t interpolation (DiscreteSchedule.sigma_to_t).

    searchsorted variant: low_idx = largest i with log_sigmas[i] <= log_sigma,
    clipped to [0, T-2] -- identical to the torch ge/cumsum/argmax construction
    (log_sigmas is monotonically increasing).
    """
    log_sigma = jnp.log(sigma)                                        # (B,)
    T = log_sigmas.shape[0]
    low_idx = jnp.clip(
        jnp.searchsorted(log_sigmas, log_sigma, side="right") - 1, 0, T - 2)
    high_idx = low_idx + 1
    low = log_sigmas[low_idx]
    high = log_sigmas[high_idx]
    w = jnp.clip((low - log_sigma) / (low - high), 0.0, 1.0)
    t = (1.0 - w) * low_idx.astype(jnp.float32) + w * high_idx.astype(jnp.float32)
    return t.astype(jnp.float32)                                      # (B,)


def sigma_to_t_torch_style(sigma, log_sigmas):
    """Literal port of the torch dists/cumsum/argmax path (reference only)."""
    log_sigma = jnp.log(sigma)
    dists = log_sigma[None, :] - log_sigmas[:, None]                  # (T, B)
    ge = (dists >= 0).astype(jnp.int32)
    low_idx = jnp.clip(jnp.argmax(jnp.cumsum(ge, axis=0), axis=0),
                       0, log_sigmas.shape[0] - 2)
    high_idx = low_idx + 1
    low = log_sigmas[low_idx]
    high = log_sigmas[high_idx]
    w = jnp.clip((low - log_sigma) / (low - high), 0.0, 1.0)
    t = (1.0 - w) * low_idx.astype(jnp.float32) + w * high_idx.astype(jnp.float32)
    return t.astype(jnp.float32)


# ----------------------------------------------------------------------------
# Fused denoiser kernel (single invocation, no grid)
# ----------------------------------------------------------------------------
def denoiser_kernel(x_ref, p_ref, o_ref):
    # x_ref: (BC, HW)     batch*channel packed into sublanes, spatial in lanes
    # p_ref: (BC, BC + 2) packed parameters:
    #          [:, :BC]     block-diagonal weights (c_in folded into columns)
    #          [:, BC]      c_out = -sigma[b]        (per-sublane)
    #          [:, BC + 1]  bias[c] + 0.001 * t[b]   (per-sublane)
    x = x_ref[...]
    p = p_ref[...]
    bc = x.shape[0]

    w = p[:, :bc]                   # (BC, BC)
    cout = p[:, bc:bc + 1]          # (BC, 1)
    bt = p[:, bc + 1:bc + 2]        # (BC, 1)

    # Single MXU matmul for the tiny channel mix: one vmatmul on the
    # vector-extended slot, freeing VPU/XLU for the epilogue.
    h = jnp.dot(w, x, preferred_element_type=jnp.float32)

    eps = jnp.tanh(h + bt)          # EUP tanh
    o_ref[...] = x + eps * cout


@jax.jit
def denoiser_forward(x, sigma, log_sigmas, w, bias):
    """x: (B, C, H, W) f32, sigma: (B,) f32. Returns (B, C, H, W) f32."""
    B, C, H, W = x.shape
    HW = H * W
    BC = B * C

    x_flat = x.reshape(BC, HW).astype(jnp.float32)      # sublane = batch*channel

    # Per-sample scalar math precomputed in the (jitted) wrapper.
    t = sigma_to_t(sigma, log_sigmas)                   # (B,)
    c_in = jax.lax.rsqrt(sigma * sigma + 1.0)           # sigma_data = 1.0
    c_out = -sigma

    # Block-diagonal weight (B copies of W); fold c_in into its columns so the
    # kernel never scales the activation.  (Valid only because the stand-in
    # inner model is linear before its tanh.)
    w_bd = jnp.kron(jnp.eye(B, dtype=w.dtype), w)       # (BC, BC)
    w_bd = w_bd * jnp.repeat(c_in, C)[None, :]

    cout_col = jnp.repeat(c_out, C).reshape(BC, 1)
    bt_col = (jnp.tile(bias, B) + jnp.repeat(0.001 * t, C)).reshape(BC, 1)

    # One packed parameter buffer -> one DMA, one padded (8,128) VMEM tile.
    params = jnp.concatenate([w_bd, cout_col, bt_col], axis=1).astype(jnp.float32)

    vmem_spec = pl.BlockSpec(memory_space=pltpu.MemorySpace.VMEM)
    out = pl.pallas_call(
        denoiser_kernel,
        out_shape=jax.ShapeDtypeStruct((BC, HW), jnp.float32),
        in_specs=[vmem_spec, vmem_spec],
        out_specs=vmem_spec,
        input_output_aliases={0: 0},                    # out aliases x_flat
    )(x_flat, params)

    return out.reshape(B, C, H, W)


# ----------------------------------------------------------------------------
# Pure-JAX reference (same math, torch-style sigma_to_t, no Pallas)
# ----------------------------------------------------------------------------
def denoiser_reference(x, sigma, log_sigmas, w, bias):
    t = sigma_to_t_torch_style(sigma, log_sigmas)
    c_in = 1.0 / jnp.sqrt(sigma ** 2 + 1.0)
    c_out = -sigma
    x_in = x * c_in[:, None, None, None]
    h = jnp.einsum("oc,bchw->bohw", w, x_in)
    eps = jnp.tanh(h + bias[None, :, None, None] + 0.001 * t[:, None, None, None])
    return x + eps * c_out[:, None, None, None]


if __name__ == "__main__":
    B, C, H, W = 2, 4, 16, 16

    sigmas = make_sigmas()
    log_sigmas = jnp.log(sigmas)

    key = jax.random.PRNGKey(0)
    k_x, k_sigma, k_w, k_b = jax.random.split(key, 4)

    x = jax.random.normal(k_x, (B, C, H, W), dtype=jnp.float32)
    sigma = jax.random.uniform(k_sigma, (B,), dtype=jnp.float32,
                               minval=0.5, maxval=10.0)

    # Deterministic synthetic inner-model parameters (1x1 conv over channels).
    w = (jax.random.normal(k_w, (C, C), dtype=jnp.float32)
         / jnp.sqrt(jnp.float32(C)))
    bias = 0.1 * jax.random.normal(k_b, (C,), dtype=jnp.float32)

    out = denoiser_forward(x, sigma, log_sigmas, w, bias)
    out = jax.block_until_ready(out)

    ref = denoiser_reference(x, sigma, log_sigmas, w, bias)
    np.testing.assert_allclose(np.asarray(out), np.asarray(ref),
                               rtol=1e-5, atol=1e-5)

    print("KERNEL_OK")
</pallas_src>

<mosaic_0001>
module attributes {stable_mosaic.version = 11 : i64} {
  func.func @denoiser_kernel(%arg0: memref<8x256xf32, #tpu.memory_space<vmem>>, %arg1: memref<8x10xf32, #tpu.memory_space<vmem>>, %arg2: memref<8x256xf32, #tpu.memory_space<vmem>>) attributes {dimension_semantics = [], scalar_prefetch = 0 : i64, scratch_operands = 0 : i64, tpu.core_type = #tpu.core_type<tc>} {
    %c0 = arith.constant 0 : index
    %c0_0 = arith.constant 0 : index
    %0 = vector.load %arg0[%c0, %c0_0] : memref<8x256xf32, #tpu.memory_space<vmem>>, vector<8x256xf32>
    %c0_1 = arith.constant 0 : index
    %c0_2 = arith.constant 0 : index
    %1 = vector.load %arg1[%c0_1, %c0_2] : memref<8x10xf32, #tpu.memory_space<vmem>>, vector<8x10xf32>
    %2 = vector.extract_strided_slice %1 {offsets = [0, 0], sizes = [8, 8], strides = [1, 1]} : vector<8x10xf32> to vector<8x8xf32>
    %3 = vector.extract_strided_slice %1 {offsets = [0, 8], sizes = [8, 1], strides = [1, 1]} : vector<8x10xf32> to vector<8x1xf32>
    %4 = vector.extract_strided_slice %1 {offsets = [0, 9], sizes = [8, 1], strides = [1, 1]} : vector<8x10xf32> to vector<8x1xf32>
    %cst = arith.constant dense<0.000000e+00> : vector<8x256xf32>
    %5 = tpu.matmul %2, %0, %cst {dimension_numbers = #tpu.dot_dimension_numbers<[1], [0], [0], [1], [0, 0, 1, 1], [], []>} : vector<8x8xf32>, vector<8x256xf32>, vector<8x256xf32> -> vector<8x256xf32>
    %6 = vector.broadcast %4 : vector<8x1xf32> to vector<8x256xf32>
    %7 = arith.addf %5, %6 : vector<8x256xf32>
    %8 = math.tanh %7 : vector<8x256xf32>
    %9 = vector.broadcast %3 : vector<8x1xf32> to vector<8x256xf32>
    %10 = arith.mulf %8, %9 : vector<8x256xf32>
    %11 = arith.addf %0, %10 : vector<8x256xf32>
    %c0_3 = arith.constant 0 : index
    %c0_4 = arith.constant 0 : index
    %12 = vector.load %arg2[%c0_3, %c0_4] : memref<8x256xf32, #tpu.memory_space<vmem>>, vector<8x256xf32>
    tpu.vector_store %arg2[%c0_3, %c0_4], %11 {strides = array<i32>} : memref<8x256xf32, #tpu.memory_space<vmem>>, vector<8x256xf32>,
    return
  }
}

</mosaic_0001>

<llo_original>
// kernel: custom-call.1
$region0: #{custom-call.1}
  %s0 = inlined_call_operand.vmem [shape: u32[2], index: 0, kind: output, shape index: {}]

// kernel: mul.26
$region0: #{mul.26}
  %s0 = inlined_call_operand.vmem [shape: f32[2,4], index: 0, kind: input, shape index: {}]
  %s1 = inlined_call_operand.vmem [shape: f32[8], index: 1, kind: output, shape index: {}]
  $region1: #{mul.26} parent=0
    #allocation0 [shape = 'u8[4096]{0}', space=vmem, size = 0x1000, scoped, tag = 'scoped mem for output reshape']
    #allocation1 [shape = 'u8[4096]{0}', space=vmem, size = 0x1000, scoped, tag = 'scoped mem for input reshape']
    %s3 = sshllo.u32 0, 2
    %v4 = vld [vmem:[%s0] sm:%s3]
    %5 = vst [vmem:[#allocation1] sm:%s3] %v4
    %v6 = vld [vmem:[#allocation1] sm:$0x1]
    %vm7 = vcmask 31744
    %8 = vst.msk [vmem:[#allocation0] sm:$0x1] %vm7, %v6
    %s9 = scalar_lea.vmem [#allocation1], 1
    %v10 = vld [vmem:[%s9] sm:$0x1]
    %11 = vrot.lane.b32.xlu0 %v10, 4
    %v12 = vpop.permute.xlu0 %11
    %vm13 = vcmask 64544
    %14 = vst.msk [vmem:[#allocation0] sm:$0x1] %vm13, %v12
    %s16 = sshllo.u32 0, 1
    %v18 = vld [vmem:[#allocation0] sm:%s16]
    %s19 = sshllo.u32 0, 1
    %20 = vst [vmem:[%s1] sm:%s19] %v18

// kernel: denoiser_forward.1
$region0: #{denoiser_forward.1}
  #allocation0 [shape = 'u32[]', space=smem, size = 0x4, offset = 0x4, fixed_abs, tag = 'smem constant byte address 0x4 - core index']
  #allocation1 [shape = 'u32[144,128]{1,0:T(1,128)}', space=vmem, size = 0x12000, scoped, tag = 'internal scratch']
  %s0 = inlined_call_operand.vmem [shape: f32[8,256], index: 0, kind: input, shape index: {}, may-alias: {0,2}]
  %s1 = inlined_call_operand.vmem [shape: f32[8,10], index: 1, kind: input, shape index: {}]
  %s2 = inlined_call_operand.vmem [shape: f32[8,256], index: 2, kind: output, shape index: {}, may-alias: {0,2}]
  %s3 = sld [smem:[#allocation0]]
  $region18: #{denoiser_forward.1} parent=0
    _
  %s5 = ssub.s32 1, %s3
  %s6 = scalar_select 0, %s5, %s3
  // Predicated region
  $region2: #{denoiser_forward.1} parent=0 // pred_check
    _
  $region3: #{denoiser_forward.1} parent=0 // pred_check_branch
    %8 = sbr.rel (0) target = $region5
  $region4: #{denoiser_forward.1} parent=0 // pred_region
    _
  $region5: #{denoiser_forward.1} parent=0 // pred_fallthru
    _
  // Predicated region
  $region6: #{denoiser_forward.1} parent=0 // pred_check
    _
  $region7: #{denoiser_forward.1} parent=0 // pred_check_branch
    %10 = sbr.rel (0) target = $region9
  $region8: #{denoiser_forward.1} parent=0 // pred_region
    _
  $region9: #{denoiser_forward.1} parent=0 // pred_fallthru
    _
  %v11 = vld [vmem:[%s0] sm:$0xff]
  %v12 = vld [vmem:[%s0 + $0x8] sm:$0xff]
  %v13 = vld [vmem:[%s1] sm:$0xff]
  %15 = vset.pattern.permute.xlu0 9
  %16 = vperm.xlu0 %15, %v13
  %v17 = vpop.permute.xlu0 %16
  %vm19 = vcmask 64512
  %v20 = vsel %vm19, %v13, 0
  %22 = vmatprep.subr.mxu0 %v12
  %23 = vmatpush1.msra.mxu0 %v11
  %24 = vmatprep.subr.mxu0 0.0
  %25 = vmatpush1.msra.mxu0 0.0
  %26 = vmatprep.subr.mxu0 0.0
  %27 = vmatpush1.msra.mxu0 0.0
  %28 = vmatprep.subr.mxu0 0.0
  %29 = vmatpush1.msra.mxu0 0.0
  %30 = vmatprep.subr.mxu0 0.0
  %31 = vmatpush1.msra.mxu0 0.0
  %32 = vmatprep.subr.mxu0 0.0
  %33 = vmatpush1.msra.mxu0 0.0
  %34 = vmatprep.subr.mxu0 0.0
  %35 = vmatpush1.msra.mxu0 0.0
  %36 = vmatprep.subr.mxu0 0.0
  %37 = vmatpush1.msra.mxu0 0.0
  %38 = vmatprep.subr.mxu0 0.0
  %39 = vmatpush1.msra.mxu0 0.0
  %40 = vmatprep.subr.mxu0 0.0
  %41 = vmatpush1.msra.mxu0 0.0
  %42 = vmatprep.subr.mxu0 0.0
  %43 = vmatpush1.msra.mxu0 0.0
  %44 = vmatprep.subr.mxu0 0.0
  %45 = vmatpush1.msra.mxu0 0.0
  %46 = vmatprep.subr.mxu0 0.0
  %47 = vmatpush1.msra.mxu0 0.0
  %48 = vmatprep.subr.mxu0 0.0
  %49 = vmatpush1.msra.mxu0 0.0
  %50 = vmatprep.subr.mxu0 0.0
  %51 = vmatpush1.msra.mxu0 0.0
  %52 = vmatprep.subr.mxu0 0.0
  %53 = vmatpush1.msra.mxu0 0.0
  %54 = vmatprep.subr.mxu0 0.0
  %55 = vmatpush1.msra.mxu0 0.0
  %56 = vmatprep.subr.mxu0 0.0
  %57 = vmatpush1.msra.mxu0 0.0
  %58 = vmatprep.subr.mxu0 0.0
  %59 = vmatpush1.msra.mxu0 0.0
  %60 = vmatprep.subr.mxu0 0.0
  %61 = vmatpush1.msra.mxu0 0.0
  %62 = vmatprep.subr.mxu0 0.0
  %63 = vmatpush1.msra.mxu0 0.0
  %64 = vmatprep.subr.mxu0 0.0
  %65 = vmatpush1.msra.mxu0 0.0
  %66 = vmatprep.subr.mxu0 0.0
  %67 = vmatpush1.msra.mxu0 0.0
  %68 = vmatprep.subr.mxu0 0.0
  %69 = vmatpush1.msra.mxu0 0.0
  %70 = vmatprep.subr.mxu0 0.0
  %71 = vmatpush1.msra.mxu0 0.0
  %72 = vmatprep.subr.mxu0 0.0
  %73 = vmatpush1.msra.mxu0 0.0
  %74 = vmatprep.subr.mxu0 0.0
  %75 = vmatpush1.msra.mxu0 0.0
  %76 = vmatprep.subr.mxu0 0.0
  %77 = vmatpush1.msra.mxu0 0.0
  %78 = vmatprep.subr.mxu0 0.0
  %79 = vmatpush1.msra.mxu0 0.0
  %80 = vmatprep.subr.mxu0 0.0
  %81 = vmatpush1.msra.mxu0 0.0
  %82 = vmatprep.subr.mxu0 0.0
  %83 = vmatpush1.msra.mxu0 0.0
  %84 = vmatprep.subr.mxu0 0.0
  %85 = vmatpush1.msra.mxu0 0.0
  %86 = vmatprep.mubr.f32.mxu0 0.0
  %87 = vmatmul.mubr.f32.gmra.mrb[0].mxu0 %v20
  %v88 = vpop.f32.mrb[0].mxu0
  %v89 = vadd.f32 %v17, %v88
  %v90 = vpop.f32.mrb[0].mxu0
  %v91 = vadd.f32 %v17, %v90
  %92 = vdwg.mxu0
  %v93 = vtanh.pop %v89
  %v94 = vtanh.pop %v91
  %95 = vset.pattern.permute.xlu0 8
  %96 = vperm.xlu0 %95, %v13
  %v97 = vpop.permute.xlu0 %96
  %v99 = vmul.f32 %v93, %v97
  %v100 = vmul.f32 %v94, %v97
  %v101 = vadd.f32 %v11, %v99
  %v102 = vadd.f32 %v12, %v100
  %103 = vst [vmem:[%s2] sm:$0xff] %v101
  %104 = vst [vmem:[%s2 + $0x8] sm:$0xff] %v102
  // Predicated region
  $region10: #{denoiser_forward.1} parent=0 // pred_check
    _
  $region11: #{denoiser_forward.1} parent=0 // pred_check_branch
    %106 = sbr.rel (0) target = $region13
  $region12: #{denoiser_forward.1} parent=0 // pred_region
    _
  $region13: #{denoiser_forward.1} parent=0 // pred_fallthru
    _
  // Predicated region
  $region14: #{denoiser_forward.1} parent=0 // pred_check
    _
  $region15: #{denoiser_forward.1} parent=0 // pred_check_branch
    %108 = sbr.rel (0) target = $region17
  $region16: #{denoiser_forward.1} parent=0 // pred_region
    _
  $region17: #{denoiser_forward.1} parent=0 // pred_fallthru
    _

</llo_original>
